<compile_context>
chip_gen: v7x
topology: tpu7x:2x2x1
jax: 0.10.0
libtpu: 0.0.40
codegen_flags: <defaults>
</compile_context>

<pallas_src>
import functools

import jax
import jax.numpy as jnp
from jax.experimental import pallas as pl
from jax.experimental.pallas import tpu as pltpu

_LANE = 128     # lane width (last dim granularity)
_SUBLANE = 8    # sublane width (second-to-last dim granularity)


def _round_up(x, m):
    return ((x + m - 1) // m) * m


def make_mlp_kernel(num_layers):
    """Kernel computing the whole MLP stack on one row-tile of x."""

    def kernel(*refs):
        # refs = (x_ref, w0, b0, w1, b1, ..., o_ref)
        x_ref = refs[0]
        o_ref = refs[-1]
        h = x_ref[...]                                  # bf16 activations
        for i in range(num_layers):
            w = refs[1 + 2 * i][...]                    # bf16 (in_p, out_p), resident
            b = refs[2 + 2 * i][...]                    # f32  (1, out_p)
            acc = jnp.dot(h, w, preferred_element_type=jnp.float32) + b
            if i < num_layers - 1:
                h = jnp.maximum(acc, 0.0).astype(jnp.bfloat16)   # F.relu, back to bf16
            else:
                h = acc                                 # last layer: no ReLU, stays f32
        o_ref[...] = h.astype(o_ref.dtype)

    return kernel


def init_mlp_params(key, input_dim, hidden_dim, output_dim, num_layers,
                    dtype=jnp.float32):
    """Deterministic synthetic init matching nn.Linear shapes (transposed: (in, out))."""
    dims_in = [input_dim] + [hidden_dim] * (num_layers - 1)
    dims_out = [hidden_dim] * (num_layers - 1) + [output_dim]
    params = []
    for n, k in zip(dims_in, dims_out):
        key, kw, kb = jax.random.split(key, 3)
        bound = 1.0 / jnp.sqrt(n)
        w = jax.random.uniform(kw, (n, k), dtype, -bound, bound)   # (in, out)
        b = jax.random.uniform(kb, (1, k), dtype, -bound, bound)   # (1, out)
        params.append((w, b))
    return params


def _pad_params(params):
    """Zero-pad layer dims to 128-lane multiples; weights -> bf16, biases -> f32."""
    padded = []
    for (w, b) in params:
        n, k = w.shape
        n_p, k_p = _round_up(n, _LANE), _round_up(k, _LANE)
        w_p = jnp.zeros((n_p, k_p), jnp.bfloat16).at[:n, :k].set(
            w.astype(jnp.bfloat16))
        b_p = jnp.zeros((1, k_p), jnp.float32).at[:, :k].set(
            b.astype(jnp.float32))
        padded.append((w_p, b_p))
    return padded


@functools.partial(jax.jit, static_argnames=("row_tile",))
def mlp_forward(x, params, *, row_tile=512):
    """Pallas MLP forward. x: (..., input_dim) -> (..., output_dim)."""
    num_layers = len(params)
    in_dim = x.shape[-1]
    out_dim = params[-1][0].shape[1]

    x2 = x.reshape(-1, in_dim)
    M = x2.shape[0]

    # Lane-pad feature dims to multiples of 128.
    in_dim_p = _round_up(in_dim, _LANE)
    out_dim_p = _round_up(out_dim, _LANE)
    padded_params = _pad_params(params)

    # Row tiling: large tiles to amortise ~0.35us per-step overhead, but keep
    # >=2 grid steps when possible so both v7x TensorCores are used.
    if M > _SUBLANE:
        tile = min(row_tile, _round_up(pl.cdiv(M, 2), _SUBLANE))
    else:
        tile = _SUBLANE
    M_p = _round_up(M, tile)

    # Pad rows to a tile multiple and cast activations to bf16 once.
    x_p = jnp.zeros((M_p, in_dim_p), jnp.bfloat16)
    x_p = x_p.at[:M, :in_dim].set(x2.astype(jnp.bfloat16))

    flat_params = []
    in_specs = [pl.BlockSpec((tile, in_dim_p), lambda i: (i, 0))]
    for (w, b) in padded_params:
        flat_params.extend([w, b])
        # Constant block index -> weights/biases stay resident in VMEM.
        in_specs.append(pl.BlockSpec(w.shape, lambda i: (0, 0)))
        in_specs.append(pl.BlockSpec(b.shape, lambda i: (0, 0)))

    out = pl.pallas_call(
        make_mlp_kernel(num_layers),
        out_shape=jax.ShapeDtypeStruct((M_p, out_dim_p), x.dtype),
        grid_spec=pltpu.PrefetchScalarGridSpec(
            num_scalar_prefetch=0,
            grid=(M_p // tile,),
            in_specs=in_specs,
            out_specs=pl.BlockSpec((tile, out_dim_p), lambda i: (i, 0)),
        ),
        compiler_params=pltpu.CompilerParams(
            dimension_semantics=("parallel",)),
    )(x_p, *flat_params)

    out = out[:M, :out_dim]
    return out.reshape(*x.shape[:-1], out_dim)


def mlp_reference_f32(x, params):
    """Plain-JAX f32 reference matching the PyTorch forward."""
    h = x
    for i, (w, b) in enumerate(params):
        h = jnp.dot(h, w) + b[0]
        if i < len(params) - 1:
            h = jnp.maximum(h, 0.0)
    return h


def mlp_reference_bf16(x, params):
    """Reference emulating the kernel arithmetic (bf16 into MXU, f32 accumulate)."""
    h = x.astype(jnp.bfloat16)
    for i, (w, b) in enumerate(params):
        acc = jnp.dot(h, w.astype(jnp.bfloat16),
                      preferred_element_type=jnp.float32) + b[0].astype(jnp.float32)
        if i < len(params) - 1:
            h = jnp.maximum(acc, 0.0).astype(jnp.bfloat16)
        else:
            h = acc
    return h.astype(x.dtype)


if __name__ == "__main__":
    # Small shapes consistent with deformable-DETR's MLP usage
    # (e.g. bbox head: (batch, num_queries, hidden_dim) -> (..., 4)).
    batch, num_queries = 2, 8
    input_dim, hidden_dim, output_dim, num_layers = 32, 64, 16, 3

    key = jax.random.PRNGKey(0)
    kx, kp = jax.random.split(key)
    x = jax.random.normal(kx, (batch, num_queries, input_dim), jnp.float32)
    params = init_mlp_params(kp, input_dim, hidden_dim, output_dim, num_layers)

    y = mlp_forward(x, params)
    y = jax.block_until_ready(y)
    assert y.shape == (batch, num_queries, output_dim)

    # Tight check against a reference that reproduces the kernel's bf16/f32 math.
    y_ref_bf16 = mlp_reference_bf16(x, params)
    assert jnp.allclose(y, y_ref_bf16, atol=1e-3, rtol=1e-3), "mismatch vs bf16 ref"

    # Loose check against the full-f32 PyTorch-equivalent reference.
    y_ref_f32 = mlp_reference_f32(x, params)
    assert jnp.allclose(y, y_ref_f32, atol=5e-2, rtol=5e-2), "mismatch vs f32 ref"

    print("KERNEL_OK")
</pallas_src>

<mosaic_0001>
module attributes {stable_mosaic.version = 11 : i64} {
  func.func @kernel(%arg0: i32, %arg1: memref<8x128xbf16, #tpu.memory_space<vmem>>, %arg2: memref<128x128xbf16, #tpu.memory_space<vmem>>, %arg3: memref<1x128xf32, #tpu.memory_space<vmem>>, %arg4: memref<128x128xbf16, #tpu.memory_space<vmem>>, %arg5: memref<1x128xf32, #tpu.memory_space<vmem>>, %arg6: memref<128x128xbf16, #tpu.memory_space<vmem>>, %arg7: memref<1x128xf32, #tpu.memory_space<vmem>>, %arg8: memref<8x128xf32, #tpu.memory_space<vmem>>) attributes {dimension_semantics = [#tpu.dimension_semantics<parallel>], iteration_bounds = array<i64: 2>, scalar_prefetch = 0 : i64, scratch_operands = 0 : i64, tpu.core_type = #tpu.core_type<tc>, window_params = [{transform_indices = @transform_0, window_bounds = array<i64: 8, 128>}, {pipeline_mode = #tpu.pipeline_mode<synchronous>, transform_indices = @transform_1, window_bounds = array<i64: 128, 128>}, {pipeline_mode = #tpu.pipeline_mode<synchronous>, transform_indices = @transform_2, window_bounds = array<i64: 1, 128>}, {pipeline_mode = #tpu.pipeline_mode<synchronous>, transform_indices = @transform_3, window_bounds = array<i64: 128, 128>}, {pipeline_mode = #tpu.pipeline_mode<synchronous>, transform_indices = @transform_4, window_bounds = array<i64: 1, 128>}, {pipeline_mode = #tpu.pipeline_mode<synchronous>, transform_indices = @transform_5, window_bounds = array<i64: 128, 128>}, {pipeline_mode = #tpu.pipeline_mode<synchronous>, transform_indices = @transform_6, window_bounds = array<i64: 1, 128>}, {transform_indices = @transform_7, window_bounds = array<i64: 8, 128>}]} {
    %c0 = arith.constant 0 : index
    %c0_0 = arith.constant 0 : index
    %0 = vector.load %arg1[%c0, %c0_0] : memref<8x128xbf16, #tpu.memory_space<vmem>>, vector<8x128xbf16>
    %c0_1 = arith.constant 0 : index
    %c0_2 = arith.constant 0 : index
    %1 = vector.load %arg2[%c0_1, %c0_2] : memref<128x128xbf16, #tpu.memory_space<vmem>>, vector<128x128xbf16>
    %c0_3 = arith.constant 0 : index
    %c0_4 = arith.constant 0 : index
    %2 = vector.load %arg3[%c0_3, %c0_4] : memref<1x128xf32, #tpu.memory_space<vmem>>, vector<1x128xf32>
    %cst = arith.constant dense<0.000000e+00> : vector<8x128xf32>
    %3 = tpu.matmul %0, %1, %cst {dimension_numbers = #tpu.dot_dimension_numbers<[1], [0], [0], [1], [0, 0, 1, 1], [], []>} : vector<8x128xbf16>, vector<128x128xbf16>, vector<8x128xf32> -> vector<8x128xf32>
    %4 = vector.broadcast %2 : vector<1x128xf32> to vector<8x128xf32>
    %5 = arith.addf %3, %4 : vector<8x128xf32>
    %cst_5 = arith.constant 0.000000e+00 : f32
    %6 = vector.broadcast %cst_5 : f32 to vector<8x128xf32>
    %7 = arith.maximumf %5, %6 : vector<8x128xf32>
    %8 = arith.truncf %7 : vector<8x128xf32> to vector<8x128xbf16>
    %c0_6 = arith.constant 0 : index
    %c0_7 = arith.constant 0 : index
    %9 = vector.load %arg4[%c0_6, %c0_7] : memref<128x128xbf16, #tpu.memory_space<vmem>>, vector<128x128xbf16>
    %c0_8 = arith.constant 0 : index
    %c0_9 = arith.constant 0 : index
    %10 = vector.load %arg5[%c0_8, %c0_9] : memref<1x128xf32, #tpu.memory_space<vmem>>, vector<1x128xf32>
    %cst_10 = arith.constant dense<0.000000e+00> : vector<8x128xf32>
    %11 = tpu.matmul %8, %9, %cst_10 {dimension_numbers = #tpu.dot_dimension_numbers<[1], [0], [0], [1], [0, 0, 1, 1], [], []>} : vector<8x128xbf16>, vector<128x128xbf16>, vector<8x128xf32> -> vector<8x128xf32>
    %12 = vector.broadcast %10 : vector<1x128xf32> to vector<8x128xf32>
    %13 = arith.addf %11, %12 : vector<8x128xf32>
    %cst_11 = arith.constant 0.000000e+00 : f32
    %14 = vector.broadcast %cst_11 : f32 to vector<8x128xf32>
    %15 = arith.maximumf %13, %14 : vector<8x128xf32>
    %16 = arith.truncf %15 : vector<8x128xf32> to vector<8x128xbf16>
    %c0_12 = arith.constant 0 : index
    %c0_13 = arith.constant 0 : index
    %17 = vector.load %arg6[%c0_12, %c0_13] : memref<128x128xbf16, #tpu.memory_space<vmem>>, vector<128x128xbf16>
    %c0_14 = arith.constant 0 : index
    %c0_15 = arith.constant 0 : index
    %18 = vector.load %arg7[%c0_14, %c0_15] : memref<1x128xf32, #tpu.memory_space<vmem>>, vector<1x128xf32>
    %cst_16 = arith.constant dense<0.000000e+00> : vector<8x128xf32>
    %19 = tpu.matmul %16, %17, %cst_16 {dimension_numbers = #tpu.dot_dimension_numbers<[1], [0], [0], [1], [0, 0, 1, 1], [], []>} : vector<8x128xbf16>, vector<128x128xbf16>, vector<8x128xf32> -> vector<8x128xf32>
    %20 = vector.broadcast %18 : vector<1x128xf32> to vector<8x128xf32>
    %21 = arith.addf %19, %20 : vector<8x128xf32>
    %c0_17 = arith.constant 0 : index
    %c0_18 = arith.constant 0 : index
    %22 = vector.load %arg8[%c0_17, %c0_18] : memref<8x128xf32, #tpu.memory_space<vmem>>, vector<8x128xf32>
    tpu.vector_store %arg8[%c0_17, %c0_18], %21 {strides = array<i32>} : memref<8x128xf32, #tpu.memory_space<vmem>>, vector<8x128xf32>,
    return
  }
  func.func @transform_0(%arg0: i32) -> (i32, i32) {
    %c0_i32 = arith.constant 0 : i32
    %c0_i32_0 = arith.constant 0 : i32
    return %arg0, %c0_i32 : i32, i32
  }
  func.func @transform_1(%arg0: i32) -> (i32, i32) {
    %c0_i32 = arith.constant 0 : i32
    %c0_i32_0 = arith.constant 0 : i32
    %c0_i32_1 = arith.constant 0 : i32
    return %c0_i32, %c0_i32_0 : i32, i32
  }
  func.func @transform_2(%arg0: i32) -> (i32, i32) {
    %c0_i32 = arith.constant 0 : i32
    %c0_i32_0 = arith.constant 0 : i32
    %c0_i32_1 = arith.constant 0 : i32
    return %c0_i32, %c0_i32_0 : i32, i32
  }
  func.func @transform_3(%arg0: i32) -> (i32, i32) {
    %c0_i32 = arith.constant 0 : i32
    %c0_i32_0 = arith.constant 0 : i32
    %c0_i32_1 = arith.constant 0 : i32
    return %c0_i32, %c0_i32_0 : i32, i32
  }
  func.func @transform_4(%arg0: i32) -> (i32, i32) {
    %c0_i32 = arith.constant 0 : i32
    %c0_i32_0 = arith.constant 0 : i32
    %c0_i32_1 = arith.constant 0 : i32
    return %c0_i32, %c0_i32_0 : i32, i32
  }
  func.func @transform_5(%arg0: i32) -> (i32, i32) {
    %c0_i32 = arith.constant 0 : i32
    %c0_i32_0 = arith.constant 0 : i32
    %c0_i32_1 = arith.constant 0 : i32
    return %c0_i32, %c0_i32_0 : i32, i32
  }
  func.func @transform_6(%arg0: i32) -> (i32, i32) {
    %c0_i32 = arith.constant 0 : i32
    %c0_i32_0 = arith.constant 0 : i32
    %c0_i32_1 = arith.constant 0 : i32
    return %c0_i32, %c0_i32_0 : i32, i32
  }
  func.func @transform_7(%arg0: i32) -> (i32, i32) {
    %c0_i32 = arith.constant 0 : i32
    %c0_i32_0 = arith.constant 0 : i32
    return %arg0, %c0_i32 : i32, i32
  }
}

</mosaic_0001>

<llo_original>
// kernel: mlp_forward.1
$region0: #{mlp_forward.1}
  #allocation0 [shape = 'u32[]', space=smem, size = 0x4, offset = 0x4, fixed_abs, tag = 'smem constant byte address 0x4 - core index']
  #allocation1 [shape = 'u32[144,128]{1,0:T(1,128)}', space=vmem, size = 0x12000, scoped, tag = 'internal scratch']
  %s0 = inlined_call_operand.vmem [shape: bf16[16,128], index: 0, kind: input, shape index: {}]
  %s1 = inlined_call_operand.vmem [shape: bf16[128,128], index: 1, kind: input, shape index: {}]
  %s2 = inlined_call_operand.vmem [shape: f32[1,128], index: 2, kind: input, shape index: {}]
  %s3 = inlined_call_operand.vmem [shape: bf16[128,128], index: 3, kind: input, shape index: {}]
  %s4 = inlined_call_operand.vmem [shape: f32[1,128], index: 4, kind: input, shape index: {}]
  %s5 = inlined_call_operand.vmem [shape: bf16[128,128], index: 5, kind: input, shape index: {}]
  %s6 = inlined_call_operand.vmem [shape: f32[1,128], index: 6, kind: input, shape index: {}]
  %s7 = inlined_call_operand.vmem [shape: f32[16,128], index: 7, kind: output, shape index: {}]
  %s8 = sld [smem:[#allocation0]]
  $region61: #{mlp_forward.1} parent=0
    _
  %s10 = ssub.s32 1, %s8
  %s11 = scalar_select 0, %s10, %s8
  loop: start=0, step=1, limit=4
  $region2: #{mlp_forward.1} parent=0 // loop_pre_header
    _
  $region3: #{mlp_forward.1} parent=0 // loop_header
    %s13 = sphi 0, %s17
    %p14 = scmp.ge.s32.totalorder %s13, 4
    %s23 = sphi 0, %s25
    %s26 = sphi 0, %s23
    %s27 = sphi 0, %s26
    %s43 = sphi 0, %s27
    %s47 = sphi 0, %s47
    %s49 = sphi 0, %s47
    %s50 = sphi 0, %s49
    %s64 = sphi 0, %s50
    %s68 = sphi 0, %s68
    %s70 = sphi 0, %s68
    %s71 = sphi 0, %s70
    %s85 = sphi 0, %s71
    %s89 = sphi 0, %s89
    %s91 = sphi 0, %s89
    %s92 = sphi 0, %s91
    %s106 = sphi 0, %s92
    %s110 = sphi 0, %s110
    %s112 = sphi 0, %s110
    %s113 = sphi 0, %s112
    %s127 = sphi 0, %s113
    %s131 = sphi 0, %s131
    %s133 = sphi 0, %s131
    %s134 = sphi 0, %s133
    %s148 = sphi 0, %s134
    %s152 = sphi 0, %s152
    %s154 = sphi 0, %s152
    %s155 = sphi 0, %s154
    %s169 = sphi 0, %s155
    %s175 = sphi 0, %s177
    %s178 = sphi 0, %s175
    %s179 = sphi 0, %s178
    %s195 = sphi 0, %s179
  $region4: #{mlp_forward.1} parent=0 // loop_header_branch
    %16 = sbr.rel (%p14) target = $region8
  $region5: #{mlp_forward.1} parent=0 // loop_body
    %s18 = ssub.s32 %s13, 1
    %s19 = ssub.s32 %s13, 2
    %s20 = sadd.s32 %s13, 1
    %s21 = ssub.s32 %s13, %s20
    %p22 = scmp.eq.s32.totalorder %s21, 0
    %s24 = sadd.s32 %s23, 1
    %s25 = scalar_select %p22, %s23, %s24
    %p28 = pneg %p22
    %p29 = scmp.eq.s32.totalorder %s13, 1
    %p30 = por %p28, %p29
    %p31 = scmp.ne.s32.totalorder %s23, %s26
    %p32 = scmp.eq.s32.totalorder %s13, 0
    %p33 = por %p31, %p32
    %p34 = scmp.ne.s32.totalorder %s23, %s26
    %p35 = scmp.eq.s32.totalorder %s18, 1
    %p36 = por %p34, %p35
    %p37 = scmp.ne.s32.totalorder %s26, %s27
    %p38 = scmp.eq.s32.totalorder %s18, 0
    %p39 = por %p37, %p38
    %p40 = scmp.ne.s32.totalorder %s26, %s27
    %p41 = scmp.eq.s32.totalorder %s19, 1
    %p42 = por %p40, %p41
    %p44 = scmp.ne.s32.totalorder %s27, %s43
    %p45 = scmp.eq.s32.totalorder %s19, 0
    %p46 = por %p44, %p45
    %s48 = sadd.s32 %s47, 1
    %p51 = scmp.eq.s32.totalorder %s13, 1
    %p52 = scmp.ne.s32.totalorder %s47, %s49
    %p53 = scmp.eq.s32.totalorder %s13, 0
    %p54 = por %p52, %p53
    %p55 = scmp.ne.s32.totalorder %s47, %s49
    %p56 = scmp.eq.s32.totalorder %s18, 1
    %p57 = por %p55, %p56
    %p58 = scmp.ne.s32.totalorder %s49, %s50
    %p59 = scmp.eq.s32.totalorder %s18, 0
    %p60 = por %p58, %p59
    %p61 = scmp.ne.s32.totalorder %s49, %s50
    %p62 = scmp.eq.s32.totalorder %s19, 1
    %p63 = por %p61, %p62
    %p65 = scmp.ne.s32.totalorder %s50, %s64
    %p66 = scmp.eq.s32.totalorder %s19, 0
    %p67 = por %p65, %p66
    %s69 = sadd.s32 %s68, 1
    %p72 = scmp.eq.s32.totalorder %s13, 1
    %p73 = scmp.ne.s32.totalorder %s68, %s70
    %p74 = scmp.eq.s32.totalorder %s13, 0
    %p75 = por %p73, %p74
    %p76 = scmp.ne.s32.totalorder %s68, %s70
    %p77 = scmp.eq.s32.totalorder %s18, 1
    %p78 = por %p76, %p77
    %p79 = scmp.ne.s32.totalorder %s70, %s71
    %p80 = scmp.eq.s32.totalorder %s18, 0
    %p81 = por %p79, %p80
    %p82 = scmp.ne.s32.totalorder %s70, %s71
    %p83 = scmp.eq.s32.totalorder %s19, 1
    %p84 = por %p82, %p83
    %p86 = scmp.ne.s32.totalorder %s71, %s85
    %p87 = scmp.eq.s32.totalorder %s19, 0
    %p88 = por %p86, %p87
    %s90 = sadd.s32 %s89, 1
    %p93 = scmp.eq.s32.totalorder %s13, 1
    %p94 = scmp.ne.s32.totalorder %s89, %s91
    %p95 = scmp.eq.s32.totalorder %s13, 0
    %p96 = por %p94, %p95
    %p97 = scmp.ne.s32.totalorder %s89, %s91
    %p98 = scmp.eq.s32.totalorder %s18, 1
    %p99 = por %p97, %p98
    %p100 = scmp.ne.s32.totalorder %s91, %s92
    %p101 = scmp.eq.s32.totalorder %s18, 0
    %p102 = por %p100, %p101
    %p103 = scmp.ne.s32.totalorder %s91, %s92
    %p104 = scmp.eq.s32.totalorder %s19, 1
    %p105 = por %p103, %p104
    %p107 = scmp.ne.s32.totalorder %s92, %s106
    %p108 = scmp.eq.s32.totalorder %s19, 0
    %p109 = por %p107, %p108
    %s111 = sadd.s32 %s110, 1
    %p114 = scmp.eq.s32.totalorder %s13, 1
    %p115 = scmp.ne.s32.totalorder %s110, %s112
    %p116 = scmp.eq.s32.totalorder %s13, 0
    %p117 = por %p115, %p116
    %p118 = scmp.ne.s32.totalorder %s110, %s112
    %p119 = scmp.eq.s32.totalorder %s18, 1
    %p120 = por %p118, %p119
    %p121 = scmp.ne.s32.totalorder %s112, %s113
    %p122 = scmp.eq.s32.totalorder %s18, 0
    %p123 = por %p121, %p122
    %p124 = scmp.ne.s32.totalorder %s112, %s113
    %p125 = scmp.eq.s32.totalorder %s19, 1
    %p126 = por %p124, %p125
    %p128 = scmp.ne.s32.totalorder %s113, %s127
    %p129 = scmp.eq.s32.totalorder %s19, 0
    %p130 = por %p128, %p129
    %s132 = sadd.s32 %s131, 1
    %p135 = scmp.eq.s32.totalorder %s13, 1
    %p136 = scmp.ne.s32.totalorder %s131, %s133
    %p137 = scmp.eq.s32.totalorder %s13, 0
    %p138 = por %p136, %p137
    %p139 = scmp.ne.s32.totalorder %s131, %s133
    %p140 = scmp.eq.s32.totalorder %s18, 1
    %p141 = por %p139, %p140
    %p142 = scmp.ne.s32.totalorder %s133, %s134
    %p143 = scmp.eq.s32.totalorder %s18, 0
    %p144 = por %p142, %p143
    %p145 = scmp.ne.s32.totalorder %s133, %s134
    %p146 = scmp.eq.s32.totalorder %s19, 1
    %p147 = por %p145, %p146
    %p149 = scmp.ne.s32.totalorder %s134, %s148
    %p150 = scmp.eq.s32.totalorder %s19, 0
    %p151 = por %p149, %p150
    %s153 = sadd.s32 %s152, 1
    %p156 = scmp.eq.s32.totalorder %s13, 1
    %p157 = scmp.ne.s32.totalorder %s152, %s154
    %p158 = scmp.eq.s32.totalorder %s13, 0
    %p159 = por %p157, %p158
    %p160 = scmp.ne.s32.totalorder %s152, %s154
    %p161 = scmp.eq.s32.totalorder %s18, 1
    %p162 = por %p160, %p161
    %p163 = scmp.ne.s32.totalorder %s154, %s155
    %p164 = scmp.eq.s32.totalorder %s18, 0
    %p165 = por %p163, %p164
    %p166 = scmp.ne.s32.totalorder %s154, %s155
    %p167 = scmp.eq.s32.totalorder %s19, 1
    %p168 = por %p166, %p167
    %p170 = scmp.ne.s32.totalorder %s155, %s169
    %p171 = scmp.eq.s32.totalorder %s19, 0
    %p172 = por %p170, %p171
    %s173 = ssub.s32 %s13, %s20
    %p174 = scmp.eq.s32.totalorder %s173, 0
    %s176 = sadd.s32 %s175, 1
    %s177 = scalar_select %p174, %s175, %s176
    %p180 = pneg %p174
    %p181 = scmp.eq.s32.totalorder %s13, 1
    %p182 = por %p180, %p181
    %p183 = scmp.ne.s32.totalorder %s175, %s178
    %p184 = scmp.eq.s32.totalorder %s13, 0
    %p185 = por %p183, %p184
    %p186 = scmp.ne.s32.totalorder %s175, %s178
    %p187 = scmp.eq.s32.totalorder %s18, 1
    %p188 = por %p186, %p187
    %p189 = scmp.ne.s32.totalorder %s178, %s179
    %p190 = scmp.eq.s32.totalorder %s18, 0
    %p191 = por %p189, %p190
    %p192 = scmp.ne.s32.totalorder %s178, %s179
    %p193 = scmp.eq.s32.totalorder %s19, 1
    %p194 = por %p192, %p193
    %p196 = scmp.ne.s32.totalorder %s179, %s195
    %p197 = scmp.eq.s32.totalorder %s19, 0
    %p198 = por %p196, %p197
    %p199 = scmp.le.s32.totalorder 1, %s13
    %p200 = scmp.lt.s32.totalorder %s13, 3
    %p201 = pnand %p199, %p200
    %p202 = pneg %p201
    // Predicated region
    $region9: #{mlp_forward.1} parent=5 // pred_check
      _
    $region10: #{mlp_forward.1} parent=5 // pred_check_branch
      %204 = sbr.rel (%p201) target = $region12
    $region11: #{mlp_forward.1} parent=5 // pred_region
      %s205 = ssub.s32 %s13, 1
      // Predicated region
      $region13: #{mlp_forward.1} parent=11 // pred_check
        %p206 = pneg %p60
      $region14: #{mlp_forward.1} parent=11 // pred_check_branch
        %208 = sbr.rel (%p206) target = $region16
      $region15: #{mlp_forward.1} parent=11 // pred_region
        _
      $region16: #{mlp_forward.1} parent=11 // pred_fallthru
        _
      // Predicated region
      $region17: #{mlp_forward.1} parent=11 // pred_check
        %p209 = pneg %p81
      $region18: #{mlp_forward.1} parent=11 // pred_check_branch
        %211 = sbr.rel (%p209) target = $region20
      $region19: #{mlp_forward.1} parent=11 // pred_region
        _
      $region20: #{mlp_forward.1} parent=11 // pred_fallthru
        _
      // Predicated region
      $region21: #{mlp_forward.1} parent=11 // pred_check
        %p212 = pneg %p102
      $region22: #{mlp_forward.1} parent=11 // pred_check_branch
        %214 = sbr.rel (%p212) target = $region24
      $region23: #{mlp_forward.1} parent=11 // pred_region
        _
      $region24: #{mlp_forward.1} parent=11 // pred_fallthru
        _
      // Predicated region
      $region25: #{mlp_forward.1} parent=11 // pred_check
        %p215 = pneg %p123
      $region26: #{mlp_forward.1} parent=11 // pred_check_branch
        %217 = sbr.rel (%p215) target = $region28
      $region27: #{mlp_forward.1} parent=11 // pred_region
        _
      $region28: #{mlp_forward.1} parent=11 // pred_fallthru
        _
      // Predicated region
      $region29: #{mlp_forward.1} parent=11 // pred_check
        %p218 = pneg %p144
      $region30: #{mlp_forward.1} parent=11 // pred_check_branch
        %220 = sbr.rel (%p218) target = $region32
      $region31: #{mlp_forward.1} parent=11 // pred_region
        _
      $region32: #{mlp_forward.1} parent=11 // pred_fallthru
        _
      // Predicated region
      $region33: #{mlp_forward.1} parent=11 // pred_check
        %p221 = pneg %p165
      $region34: #{mlp_forward.1} parent=11 // pred_check_branch
        %223 = sbr.rel (%p221) target = $region36
      $region35: #{mlp_forward.1} parent=11 // pred_region
        _
      $region36: #{mlp_forward.1} parent=11 // pred_fallthru
        _
    $region12: #{mlp_forward.1} parent=5 // pred_fallthru
      _
    %p224 = scmp.lt.s32.totalorder %s13, 2
    // Predicated region
    $region37: #{mlp_forward.1} parent=5 // pred_check
      %p225 = pneg %p224
    $region38: #{mlp_forward.1} parent=5 // pred_check_branch
      %227 = sbr.rel (%p225) target = $region40
    $region39: #{mlp_forward.1} parent=5 // pred_region
      // Predicated region
      $region41: #{mlp_forward.1} parent=39 // pred_check
        %p228 = pneg %p33
      $region42: #{mlp_forward.1} parent=39 // pred_check_branch
        %230 = sbr.rel (%p228) target = $region44
      $region43: #{mlp_forward.1} parent=39 // pred_region
        %p231 = scmp.lt.s32.totalorder %s13, 1
        %s232 = scalar_select %p231, %s13, 1
        %s233 = smul.addr %s232, 4
        %s234 = scalar_lea.vmem %s0, %s233
      $region44: #{mlp_forward.1} parent=39 // pred_fallthru
        _
    $region40: #{mlp_forward.1} parent=5 // pred_fallthru
      _
    %p235 = scmp.le.s32.totalorder 1, %s13
    %p236 = scmp.lt.s32.totalorder %s13, 3
    %p237 = pnand %p235, %p236
    %p238 = pneg %p237
    // Predicated region
    $region45: #{mlp_forward.1} parent=5 // pred_check
      _
    $region46: #{mlp_forward.1} parent=5 // pred_check_branch
      %240 = sbr.rel (%p237) target = $region48
    $region47: #{mlp_forward.1} parent=5 // pred_region
      %s241 = ssub.s32 %s13, 1
      %p242 = scmp.lt.s32.totalorder %s18, 1
      %s243 = scalar_select %p242, %s18, 1
      %s244 = smul.addr %s243, 4
      %s245 = scalar_lea.vmem %s0, %s244
      %p246 = pneg %p39
      %p247 = pneg %p36
      %p248 = pneg %p60
      %p249 = pneg %p57
      %p250 = pneg %p81
      %p251 = pneg %p78
      %p252 = pneg %p102
      %p253 = pneg %p99
      %p254 = pneg %p123
      %p255 = pneg %p120
      %p256 = pneg %p144
      %p257 = pneg %p141
      %p258 = pneg %p165
      %p259 = pneg %p162
      %p260 = pneg %p191
      %p261 = pneg %p188
      %p262 = scmp.lt.s32.totalorder %s18, 1
      %s263 = scalar_select %p262, %s18, 1
      %s264 = smul.addr %s263, 8
      %s265 = scalar_lea.vmem %s7, %s264
      %p266 = scmp.lt.s32.totalorder %s18, 1
      %s267 = scalar_select %p266, %s18, 1
      %s268 = smul.addr %s267, 4
      %s269 = scalar_lea.vmem %s0, %s268
      %p270 = scmp.lt.s32.totalorder %s18, 1
      %s271 = scalar_select %p270, %s18, 1
      %s272 = smul.addr %s271, 8
      %s273 = scalar_lea.vmem %s7, %s272
      %v275 = vld [vmem:[%s269] sm:$0xf]
      %v276 = vld [vmem:[%s1] sm:$0xf]
      %v277 = vld [vmem:[%s1 + $0x4] sm:$0xf]
      %v278 = vld [vmem:[%s1 + $0x8] sm:$0xf]
      %v279 = vld [vmem:[%s1 + $0xc] sm:$0xf]
      %v280 = vld [vmem:[%s1 + $0x10] sm:$0xf]
      %v281 = vld [vmem:[%s1 + $0x14] sm:$0xf]
      %v282 = vld [vmem:[%s1 + $0x18] sm:$0xf]
      %v283 = vld [vmem:[%s1 + $0x1c] sm:$0xf]
      %v284 = vld [vmem:[%s1 + $0x20] sm:$0xf]
      %v285 = vld [vmem:[%s1 + $0x24] sm:$0xf]
      %v286 = vld [vmem:[%s1 + $0x28] sm:$0xf]
      %v287 = vld [vmem:[%s1 + $0x2c] sm:$0xf]
      %v288 = vld [vmem:[%s1 + $0x30] sm:$0xf]
      %v289 = vld [vmem:[%s1 + $0x34] sm:$0xf]
      %v290 = vld [vmem:[%s1 + $0x38] sm:$0xf]
      %v291 = vld [vmem:[%s1 + $0x3c] sm:$0xf]
      %v292 = vld [vmem:[%s2] sm:$0x1]
      %v294 = vlaneseq
      %v295 = vshrl.u32 %v294, 7
      %v296 = vsub.s32 0, %v295
      %v297 = vrot.slane %v292, %v296
      %v315 = vunpack.c.l.b16 %v276
      %v316 = vunpack.c.l.b16 %v277
      %v317 = vunpack.c.l.b16 %v278
      %v318 = vunpack.c.l.b16 %v279
      %v319 = vunpack.c.l.b16 %v280
      %v320 = vunpack.c.l.b16 %v281
      %v321 = vunpack.c.l.b16 %v282
      %v322 = vunpack.c.l.b16 %v283
      %v323 = vunpack.c.l.b16 %v284
      %v324 = vunpack.c.l.b16 %v285
      %v325 = vunpack.c.l.b16 %v286
      %v326 = vunpack.c.l.b16 %v287
      %v327 = vunpack.c.l.b16 %v288
      %v328 = vunpack.c.l.b16 %v289
      %v329 = vunpack.c.l.b16 %v290
      %v330 = vunpack.c.l.b16 %v291
      %v331 = vpack.c.b16 %v316, %v315
      %v332 = vpack.c.b16 %v318, %v317
      %v333 = vpack.c.b16 %v320, %v319
      %v334 = vpack.c.b16 %v322, %v321
      %v335 = vpack.c.b16 %v324, %v323
      %v336 = vpack.c.b16 %v326, %v325
      %v337 = vpack.c.b16 %v328, %v327
      %v338 = vpack.c.b16 %v330, %v329
      %347 = vmatprep.subr.bf16.mxu0 0
      %348 = vmatpush1.bf16.msra.mxu0 %v331
      %349 = vmatprep.subr.bf16.mxu0 0
      %350 = vmatpush1.bf16.msra.mxu0 %v332
      %351 = vmatprep.subr.bf16.mxu0 0
      %352 = vmatpush1.bf16.msra.mxu0 %v333
      %353 = vmatprep.subr.bf16.mxu0 0
      %354 = vmatpush1.bf16.msra.mxu0 %v334
      %355 = vmatprep.subr.bf16.mxu0 0
      %356 = vmatpush1.bf16.msra.mxu0 %v335
      %357 = vmatprep.subr.bf16.mxu0 0
      %358 = vmatpush1.bf16.msra.mxu0 %v336
      %359 = vmatprep.subr.bf16.mxu0 0
      %360 = vmatpush1.bf16.msra.mxu0 %v337
      %361 = vmatprep.subr.bf16.mxu0 0
      %362 = vmatpush1.bf16.msra.mxu0 %v338
      %363 = vmatprep.subr.bf16.mxu0 0
      %364 = vmatpush1.bf16.msra.mxu0 0
      %365 = vmatprep.subr.bf16.mxu0 0
      %366 = vmatpush1.bf16.msra.mxu0 0
      %367 = vmatprep.subr.bf16.mxu0 0
      %368 = vmatpush1.bf16.msra.mxu0 0
      %369 = vmatprep.subr.bf16.mxu0 0
      %370 = vmatpush1.bf16.msra.mxu0 0
      %371 = vmatprep.subr.bf16.mxu0 0
      %372 = vmatpush1.bf16.msra.mxu0 0
      %373 = vmatprep.subr.bf16.mxu0 0
      %374 = vmatpush1.bf16.msra.mxu0 0
      %375 = vmatprep.subr.bf16.mxu0 0
      %376 = vmatpush1.bf16.msra.mxu0 0
      %377 = vmatprep.subr.bf16.mxu0 0
      %378 = vmatpush1.bf16.msra.mxu0 0
      %379 = vmatprep.mubr.bf16.mxu0 0
      %380 = vmatmul.mubr.bf16.gmra.mrb[0].mxu0 %v275
      %v381 = vpop.f32.mrb[0].mxu0
      %v382 = vadd.f32 %v297, %v381
      %v383 = vpop.f32.mrb[0].mxu0
      %v384 = vpop.f32.mrb[0].mxu0
      %v385 = vpop.f32.mrb[0].mxu0
      %386 = vdwg.mxu0
      %v387 = vmax.f32 %v382, 0.0
      %v388 = vpack.c.bf16 %v387, %v387
      %v389 = vld [vmem:[%s3] sm:$0xf]
      %v390 = vld [vmem:[%s3 + $0x4] sm:$0xf]
      %v391 = vld [vmem:[%s3 + $0x8] sm:$0xf]
      %v392 = vld [vmem:[%s3 + $0xc] sm:$0xf]
      %v393 = vld [vmem:[%s3 + $0x10] sm:$0xf]
      %v394 = vld [vmem:[%s3 + $0x14] sm:$0xf]
      %v395 = vld [vmem:[%s3 + $0x18] sm:$0xf]
      %v396 = vld [vmem:[%s3 + $0x1c] sm:$0xf]
      %v397 = vld [vmem:[%s3 + $0x20] sm:$0xf]
      %v398 = vld [vmem:[%s3 + $0x24] sm:$0xf]
      %v399 = vld [vmem:[%s3 + $0x28] sm:$0xf]
      %v400 = vld [vmem:[%s3 + $0x2c] sm:$0xf]
      %v401 = vld [vmem:[%s3 + $0x30] sm:$0xf]
      %v402 = vld [vmem:[%s3 + $0x34] sm:$0xf]
      %v403 = vld [vmem:[%s3 + $0x38] sm:$0xf]
      %v404 = vld [vmem:[%s3 + $0x3c] sm:$0xf]
      %v405 = vld [vmem:[%s4] sm:$0x1]
      %v407 = vlaneseq
      %v408 = vshrl.u32 %v407, 7
      %v409 = vsub.s32 0, %v408
      %v410 = vrot.slane %v405, %v409
      %v428 = vunpack.c.l.b16 %v389
      %v429 = vunpack.c.l.b16 %v390
      %v430 = vunpack.c.l.b16 %v391
      %v431 = vunpack.c.l.b16 %v392
      %v432 = vunpack.c.l.b16 %v393
      %v433 = vunpack.c.l.b16 %v394
      %v434 = vunpack.c.l.b16 %v395
      %v435 = vunpack.c.l.b16 %v396
      %v436 = vunpack.c.l.b16 %v397
      %v437 = vunpack.c.l.b16 %v398
      %v438 = vunpack.c.l.b16 %v399
      %v439 = vunpack.c.l.b16 %v400
      %v440 = vunpack.c.l.b16 %v401
      %v441 = vunpack.c.l.b16 %v402
      %v442 = vunpack.c.l.b16 %v403
      %v443 = vunpack.c.l.b16 %v404
      %v444 = vpack.c.b16 %v429, %v428
      %v445 = vpack.c.b16 %v431, %v430
      %v446 = vpack.c.b16 %v433, %v432
      %v447 = vpack.c.b16 %v435, %v434
      %v448 = vpack.c.b16 %v437, %v436
      %v449 = vpack.c.b16 %v439, %v438
      %v450 = vpack.c.b16 %v441, %v440
      %v451 = vpack.c.b16 %v443, %v442
      %460 = vmatprep.subr.bf16.mxu0 0
      %461 = vmatpush1.bf16.msra.mxu0 %v444
      %462 = vmatprep.subr.bf16.mxu0 0
      %463 = vmatpush1.bf16.msra.mxu0 %v445
      %464 = vmatprep.subr.bf16.mxu0 0
      %465 = vmatpush1.bf16.msra.mxu0 %v446
      %466 = vmatprep.subr.bf16.mxu0 0
      %467 = vmatpush1.bf16.msra.mxu0 %v447
      %468 = vmatprep.subr.bf16.mxu0 0
      %469 = vmatpush1.bf16.msra.mxu0 %v448
      %470 = vmatprep.subr.bf16.mxu0 0
      %471 = vmatpush1.bf16.msra.mxu0 %v449
      %472 = vmatprep.subr.bf16.mxu0 0
      %473 = vmatpush1.bf16.msra.mxu0 %v450
      %474 = vmatprep.subr.bf16.mxu0 0
      %475 = vmatpush1.bf16.msra.mxu0 %v451
      %476 = vmatprep.subr.bf16.mxu0 0
      %477 = vmatpush1.bf16.msra.mxu0 0
      %478 = vmatprep.subr.bf16.mxu0 0
      %479 = vmatpush1.bf16.msra.mxu0 0
      %480 = vmatprep.subr.bf16.mxu0 0
      %481 = vmatpush1.bf16.msra.mxu0 0
      %482 = vmatprep.subr.bf16.mxu0 0
      %483 = vmatpush1.bf16.msra.mxu0 0
      %484 = vmatprep.subr.bf16.mxu0 0
      %485 = vmatpush1.bf16.msra.mxu0 0
      %486 = vmatprep.subr.bf16.mxu0 0
      %487 = vmatpush1.bf16.msra.mxu0 0
      %488 = vmatprep.subr.bf16.mxu0 0
      %489 = vmatpush1.bf16.msra.mxu0 0
      %490 = vmatprep.subr.bf16.mxu0 0
      %491 = vmatpush1.bf16.msra.mxu0 0
      %492 = vmatprep.mubr.bf16.mxu0 0
      %493 = vmatmul.mubr.bf16.gmra.mrb[0].mxu0 %v388
      %v494 = vpop.f32.mrb[0].mxu0
      %v495 = vadd.f32 %v410, %v494
      %v496 = vpop.f32.mrb[0].mxu0
      %v497 = vpop.f32.mrb[0].mxu0
      %v498 = vpop.f32.mrb[0].mxu0
      %499 = vdwg.mxu0
      %v500 = vmax.f32 %v495, 0.0
      %v501 = vpack.c.bf16 %v500, %v500
      %v502 = vld [vmem:[%s5] sm:$0xf]
      %v503 = vld [vmem:[%s5 + $0x4] sm:$0xf]
      %v504 = vld [vmem:[%s5 + $0x8] sm:$0xf]
      %v505 = vld [vmem:[%s5 + $0xc] sm:$0xf]
      %v506 = vld [vmem:[%s5 + $0x10] sm:$0xf]
      %v507 = vld [vmem:[%s5 + $0x14] sm:$0xf]
      %v508 = vld [vmem:[%s5 + $0x18] sm:$0xf]
      %v509 = vld [vmem:[%s5 + $0x1c] sm:$0xf]
      %v510 = vld [vmem:[%s5 + $0x20] sm:$0xf]
      %v511 = vld [vmem:[%s5 + $0x24] sm:$0xf]
      %v512 = vld [vmem:[%s5 + $0x28] sm:$0xf]
      %v513 = vld [vmem:[%s5 + $0x2c] sm:$0xf]
      %v514 = vld [vmem:[%s5 + $0x30] sm:$0xf]
      %v515 = vld [vmem:[%s5 + $0x34] sm:$0xf]
      %v516 = vld [vmem:[%s5 + $0x38] sm:$0xf]
      %v517 = vld [vmem:[%s5 + $0x3c] sm:$0xf]
      %v518 = vld [vmem:[%s6] sm:$0x1]
      %v520 = vlaneseq
      %v521 = vshrl.u32 %v520, 7
      %v522 = vsub.s32 0, %v521
      %v523 = vrot.slane %v518, %v522
      %v541 = vunpack.c.l.b16 %v502
      %v542 = vunpack.c.l.b16 %v503
      %v543 = vunpack.c.l.b16 %v504
      %v544 = vunpack.c.l.b16 %v505
      %v545 = vunpack.c.l.b16 %v506
      %v546 = vunpack.c.l.b16 %v507
      %v547 = vunpack.c.l.b16 %v508
      %v548 = vunpack.c.l.b16 %v509
      %v549 = vunpack.c.l.b16 %v510
      %v550 = vunpack.c.l.b16 %v511
      %v551 = vunpack.c.l.b16 %v512
      %v552 = vunpack.c.l.b16 %v513
      %v553 = vunpack.c.l.b16 %v514
      %v554 = vunpack.c.l.b16 %v515
      %v555 = vunpack.c.l.b16 %v516
      %v556 = vunpack.c.l.b16 %v517
      %v557 = vpack.c.b16 %v542, %v541
      %v558 = vpack.c.b16 %v544, %v543
      %v559 = vpack.c.b16 %v546, %v545
      %v560 = vpack.c.b16 %v548, %v547
      %v561 = vpack.c.b16 %v550, %v549
      %v562 = vpack.c.b16 %v552, %v551
      %v563 = vpack.c.b16 %v554, %v553
      %v564 = vpack.c.b16 %v556, %v555
      %573 = vmatprep.subr.bf16.mxu0 0
      %574 = vmatpush1.bf16.msra.mxu0 %v557
      %575 = vmatprep.subr.bf16.mxu0 0
      %576 = vmatpush1.bf16.msra.mxu0 %v558
      %577 = vmatprep.subr.bf16.mxu0 0
      %578 = vmatpush1.bf16.msra.mxu0 %v559
      %579 = vmatprep.subr.bf16.mxu0 0
      %580 = vmatpush1.bf16.msra.mxu0 %v560
      %581 = vmatprep.subr.bf16.mxu0 0
      %582 = vmatpush1.bf16.msra.mxu0 %v561
      %583 = vmatprep.subr.bf16.mxu0 0
      %584 = vmatpush1.bf16.msra.mxu0 %v562
      %585 = vmatprep.subr.bf16.mxu0 0
      %586 = vmatpush1.bf16.msra.mxu0 %v563
      %587 = vmatprep.subr.bf16.mxu0 0
      %588 = vmatpush1.bf16.msra.mxu0 %v564
      %589 = vmatprep.subr.bf16.mxu0 0
      %590 = vmatpush1.bf16.msra.mxu0 0
      %591 = vmatprep.subr.bf16.mxu0 0
      %592 = vmatpush1.bf16.msra.mxu0 0
      %593 = vmatprep.subr.bf16.mxu0 0
      %594 = vmatpush1.bf16.msra.mxu0 0
      %595 = vmatprep.subr.bf16.mxu0 0
      %596 = vmatpush1.bf16.msra.mxu0 0
      %597 = vmatprep.subr.bf16.mxu0 0
      %598 = vmatpush1.bf16.msra.mxu0 0
      %599 = vmatprep.subr.bf16.mxu0 0
      %600 = vmatpush1.bf16.msra.mxu0 0
      %601 = vmatprep.subr.bf16.mxu0 0
      %602 = vmatpush1.bf16.msra.mxu0 0
      %603 = vmatprep.subr.bf16.mxu0 0
      %604 = vmatpush1.bf16.msra.mxu0 0
      %605 = vmatprep.mubr.bf16.mxu0 0
      %606 = vmatmul.mubr.bf16.gmra.mrb[0].mxu0 %v501
      %v607 = vpop.f32.mrb[0].mxu0
      %v608 = vadd.f32 %v523, %v607
      %v609 = vpop.f32.mrb[0].mxu0
      %v610 = vpop.f32.mrb[0].mxu0
      %v611 = vpop.f32.mrb[0].mxu0
      %612 = vdwg.mxu0
      %613 = vst [vmem:[%s273] sm:$0xff] %v608
      %p614 = scmp.lt.s32.totalorder %s18, 1
      %s615 = scalar_select %p614, %s18, 1
      %s616 = smul.addr %s615, 8
      %s617 = scalar_lea.vmem %s7, %s616
      // Predicated region
      $region49: #{mlp_forward.1} parent=47 // pred_check
        %p618 = pneg %p188
      $region50: #{mlp_forward.1} parent=47 // pred_check_branch
        %620 = sbr.rel (%p618) target = $region52
      $region51: #{mlp_forward.1} parent=47 // pred_region
        _
      $region52: #{mlp_forward.1} parent=47 // pred_fallthru
        _
    $region48: #{mlp_forward.1} parent=5 // pred_fallthru
      _
    %p621 = scmp.le.s32.totalorder 2, %s13
    // Predicated region
    $region53: #{mlp_forward.1} parent=5 // pred_check
      %p622 = pneg %p621
    $region54: #{mlp_forward.1} parent=5 // pred_check_branch
      %624 = sbr.rel (%p622) target = $region56
    $region55: #{mlp_forward.1} parent=5 // pred_region
      %s625 = ssub.s32 %s13, 2
      // Predicated region
      $region57: #{mlp_forward.1} parent=55 // pred_check
        %p626 = pneg %p194
      $region58: #{mlp_forward.1} parent=55 // pred_check_branch
        %628 = sbr.rel (%p626) target = $region60
      $region59: #{mlp_forward.1} parent=55 // pred_region
        %p629 = scmp.lt.s32.totalorder %s19, 1
        %s630 = scalar_select %p629, %s19, 1
        %s631 = smul.addr %s630, 8
        %s632 = scalar_lea.vmem %s7, %s631
      $region60: #{mlp_forward.1} parent=55 // pred_fallthru
        _
    $region56: #{mlp_forward.1} parent=5 // pred_fallthru
      _
  $region6: #{mlp_forward.1} parent=0 // loop_footer
    %s17 = sadd.s32 1, %s13
  $region7: #{mlp_forward.1} parent=0 // loop_footer_branch
    %12 = sbr.rel target = $region3
  $region8: #{mlp_forward.1} parent=0 // loop_exit
    _

</llo_original>
